<compile_context>
chip_gen: v5e
topology: v5e:2x2
jax: 0.10.0
libtpu: 0.0.40
codegen_flags: <defaults>
</compile_context>

<pallas_src>
import functools

import jax
import jax.numpy as jnp
from jax.experimental import pallas as pl
from jax.experimental.pallas import tpu as pltpu


# ----------------------------- Pallas kernel ------------------------------- #

def _fused_mlp_kernel(x_ref,
                      w1_ref, b1_ref,
                      w2_ref, b2_ref,
                      w3_ref, b3_ref,
                      w4_ref, b4_ref,
                      o_ref):
    """Whole 4-layer MLP for one batch tile. bf16 MXU inputs, f32 accumulate/VPU."""
    h = x_ref[...].astype(jnp.bfloat16)

    # Layer 1: (TB, W) @ (W, H1) + b1, ReLU
    h = jnp.dot(h, w1_ref[...], preferred_element_type=jnp.float32)
    h = jnp.maximum(h + b1_ref[...], 0.0)

    # Layer 2: (TB, H1) @ (H1, E) + b2, ReLU
    h = jnp.dot(h.astype(jnp.bfloat16), w2_ref[...],
                preferred_element_type=jnp.float32)
    h = jnp.maximum(h + b2_ref[...], 0.0)

    # Layer 3 (classifier hidden): (TB, E) @ (E, H2) + b3, ReLU
    h = jnp.dot(h.astype(jnp.bfloat16), w3_ref[...],
                preferred_element_type=jnp.float32)
    h = jnp.maximum(h + b3_ref[...], 0.0)

    # Layer 4 (class head): (TB, H2) @ (H2, C) + b4, no activation
    h = jnp.dot(h.astype(jnp.bfloat16), w4_ref[...],
                preferred_element_type=jnp.float32)
    h = h + b4_ref[...]

    o_ref[...] = h.astype(o_ref.dtype)


# --------------------------- Model definition ------------------------------ #

WINDOW_SIZE = 128      # window_size (lane-aligned)
H1 = 64                # siamese_linear hidden
EMBEDDING_DIM = 32     # pre_model.layers[-1].linear.out_features
H2 = 16                # classifier hidden ("linear_1")
CLASS_DIM = 2          # output_dim == -1 -> class_dim


def init_params(key):
    """Deterministic parameter init. Weights stored as (in, out)."""
    dims = [(WINDOW_SIZE, H1), (H1, EMBEDDING_DIM),
            (EMBEDDING_DIM, H2), (H2, CLASS_DIM)]
    params = []
    for (din, dout) in dims:
        key, kw, kb = jax.random.split(key, 3)
        scale = 1.0 / jnp.sqrt(jnp.float32(din))
        w = jax.random.uniform(kw, (din, dout), jnp.float32, -scale, scale)
        b = jax.random.uniform(kb, (1, dout), jnp.float32, -scale, scale)
        params.append((w, b))
    return params


def _round_up(x, m):
    return -(-x // m) * m


@functools.partial(jax.jit, static_argnames=("batch_tile",))
def classificator_forward(x, params, *, batch_tile=512):
    """Mirrors Classificator.forward.

    x: (B, 1, WINDOW_SIZE) -> squeeze -> pre_model.forward_once -> classifier.
    Returns (B, CLASS_DIM) logits.
    """
    B = x.shape[0]
    feats = x.reshape(B, x.shape[-1])                     # squeeze channel axis

    # Pad batch to a sublane multiple (>=8) and to a multiple of the batch tile.
    Bp = max(8, _round_up(B, 8))
    TB = min(batch_tile, Bp)
    Bp = _round_up(Bp, TB)
    if Bp != B:
        feats = jnp.pad(feats, ((0, Bp - B), (0, 0)))

    (w1, b1), (w2, b2), (w3, b3), (w4, b4) = params
    # Cast weights to bf16 once (outside the kernel) -> no per-grid-step cast.
    w1b, w2b, w3b, w4b = (w.astype(jnp.bfloat16) for w in (w1, w2, w3, w4))

    grid = (Bp // TB,)

    def const_spec(shape):
        # Weights / biases: full-extent block, same block every grid step
        # -> resident in VMEM, no re-DMA.
        return pl.BlockSpec(shape, lambda i: (0, 0))

    flops = 2 * Bp * (WINDOW_SIZE * H1 + H1 * EMBEDDING_DIM
                      + EMBEDDING_DIM * H2 + H2 * CLASS_DIM)
    weight_bytes = (sum(int(w.size) * 2 for w in (w1b, w2b, w3b, w4b))
                    + sum(int(b.size) * 4 for b in (b1, b2, b3, b4)))
    bytes_accessed = Bp * WINDOW_SIZE * 4 + weight_bytes + Bp * CLASS_DIM * 4

    logits = pl.pallas_call(
        _fused_mlp_kernel,
        out_shape=jax.ShapeDtypeStruct((Bp, CLASS_DIM), jnp.float32),
        grid_spec=pltpu.PrefetchScalarGridSpec(
            num_scalar_prefetch=0,
            grid=grid,
            in_specs=[
                pl.BlockSpec((TB, WINDOW_SIZE), lambda i: (i, 0)),   # x tile
                const_spec(w1b.shape), const_spec(b1.shape),
                const_spec(w2b.shape), const_spec(b2.shape),
                const_spec(w3b.shape), const_spec(b3.shape),
                const_spec(w4b.shape), const_spec(b4.shape),
            ],
            out_specs=pl.BlockSpec((TB, CLASS_DIM), lambda i: (i, 0)),
        ),
        compiler_params=pltpu.CompilerParams(
            dimension_semantics=("parallel",),
        ),
        cost_estimate=pl.CostEstimate(
            flops=flops, transcendentals=0, bytes_accessed=bytes_accessed),
    )(feats, w1b, b1, w2b, b2, w3b, b3, w4b, b4)

    return logits[:B]


# --------------------------------- Main ------------------------------------ #

if __name__ == "__main__":
    key = jax.random.PRNGKey(0)
    key, kx = jax.random.split(key)

    B = 2
    x = jax.random.normal(kx, (B, 1, WINDOW_SIZE), jnp.float32)   # (N, C=1, L)
    params = init_params(key)

    out = classificator_forward(x, params)
    out = jax.block_until_ready(out)

    assert out.shape == (B, CLASS_DIM), out.shape
    assert bool(jnp.all(jnp.isfinite(out)))

    # Sanity check against a pure-JAX reference that mirrors the kernel's
    # bf16-matmul / f32-accumulate arithmetic.
    ref = x.reshape(B, WINDOW_SIZE)
    for idx, (w, b) in enumerate(params):
        ref = jnp.dot(ref.astype(jnp.bfloat16), w.astype(jnp.bfloat16),
                      preferred_element_type=jnp.float32) + b
        if idx < 3:
            ref = jnp.maximum(ref, 0.0)
    assert jnp.allclose(out, ref, rtol=2e-2, atol=2e-2), (out, ref)

    print("KERNEL_OK")
</pallas_src>

<mosaic_0001>
module attributes {stable_mosaic.version = 11 : i64} {
  func.func @_fused_mlp_kernel(%arg0: i32, %arg1: memref<8x128xf32, #tpu.memory_space<vmem>>, %arg2: memref<128x64xbf16, #tpu.memory_space<vmem>>, %arg3: memref<1x64xf32, #tpu.memory_space<vmem>>, %arg4: memref<64x32xbf16, #tpu.memory_space<vmem>>, %arg5: memref<1x32xf32, #tpu.memory_space<vmem>>, %arg6: memref<32x16xbf16, #tpu.memory_space<vmem>>, %arg7: memref<1x16xf32, #tpu.memory_space<vmem>>, %arg8: memref<16x2xbf16, #tpu.memory_space<vmem>>, %arg9: memref<1x2xf32, #tpu.memory_space<vmem>>, %arg10: memref<8x2xf32, #tpu.memory_space<vmem>>) attributes {dimension_semantics = [#tpu.dimension_semantics<parallel>], iteration_bounds = array<i64: 1>, scalar_prefetch = 0 : i64, scratch_operands = 0 : i64, tpu.core_type = #tpu.core_type<tc>, window_params = [{transform_indices = @transform_0, window_bounds = array<i64: 8, 128>}, {pipeline_mode = #tpu.pipeline_mode<synchronous>, transform_indices = @transform_1, window_bounds = array<i64: 128, 64>}, {pipeline_mode = #tpu.pipeline_mode<synchronous>, transform_indices = @transform_2, window_bounds = array<i64: 1, 64>}, {pipeline_mode = #tpu.pipeline_mode<synchronous>, transform_indices = @transform_3, window_bounds = array<i64: 64, 32>}, {pipeline_mode = #tpu.pipeline_mode<synchronous>, transform_indices = @transform_4, window_bounds = array<i64: 1, 32>}, {pipeline_mode = #tpu.pipeline_mode<synchronous>, transform_indices = @transform_5, window_bounds = array<i64: 32, 16>}, {pipeline_mode = #tpu.pipeline_mode<synchronous>, transform_indices = @transform_6, window_bounds = array<i64: 1, 16>}, {pipeline_mode = #tpu.pipeline_mode<synchronous>, transform_indices = @transform_7, window_bounds = array<i64: 16, 2>}, {pipeline_mode = #tpu.pipeline_mode<synchronous>, transform_indices = @transform_8, window_bounds = array<i64: 1, 2>}, {transform_indices = @transform_9, window_bounds = array<i64: 8, 2>}]} {
    %c0 = arith.constant 0 : index
    %c0_0 = arith.constant 0 : index
    %0 = vector.load %arg1[%c0, %c0_0] : memref<8x128xf32, #tpu.memory_space<vmem>>, vector<8x128xf32>
    %1 = arith.truncf %0 : vector<8x128xf32> to vector<8x128xbf16>
    %c0_1 = arith.constant 0 : index
    %c0_2 = arith.constant 0 : index
    %2 = vector.load %arg2[%c0_1, %c0_2] : memref<128x64xbf16, #tpu.memory_space<vmem>>, vector<128x64xbf16>
    %cst = arith.constant dense<0.000000e+00> : vector<8x64xf32>
    %3 = tpu.matmul %1, %2, %cst {dimension_numbers = #tpu.dot_dimension_numbers<[1], [0], [0], [1], [0, 0, 1, 1], [], []>} : vector<8x128xbf16>, vector<128x64xbf16>, vector<8x64xf32> -> vector<8x64xf32>
    %c0_3 = arith.constant 0 : index
    %c0_4 = arith.constant 0 : index
    %4 = vector.load %arg3[%c0_3, %c0_4] : memref<1x64xf32, #tpu.memory_space<vmem>>, vector<1x64xf32>
    %5 = vector.broadcast %4 : vector<1x64xf32> to vector<8x64xf32>
    %6 = arith.addf %3, %5 : vector<8x64xf32>
    %cst_5 = arith.constant 0.000000e+00 : f32
    %7 = vector.broadcast %cst_5 : f32 to vector<8x64xf32>
    %8 = arith.maximumf %6, %7 : vector<8x64xf32>
    %9 = arith.truncf %8 : vector<8x64xf32> to vector<8x64xbf16>
    %c0_6 = arith.constant 0 : index
    %c0_7 = arith.constant 0 : index
    %10 = vector.load %arg4[%c0_6, %c0_7] : memref<64x32xbf16, #tpu.memory_space<vmem>>, vector<64x32xbf16>
    %cst_8 = arith.constant dense<0.000000e+00> : vector<8x32xf32>
    %11 = tpu.matmul %9, %10, %cst_8 {dimension_numbers = #tpu.dot_dimension_numbers<[1], [0], [0], [1], [0, 0, 1, 1], [], []>} : vector<8x64xbf16>, vector<64x32xbf16>, vector<8x32xf32> -> vector<8x32xf32>
    %c0_9 = arith.constant 0 : index
    %c0_10 = arith.constant 0 : index
    %12 = vector.load %arg5[%c0_9, %c0_10] : memref<1x32xf32, #tpu.memory_space<vmem>>, vector<1x32xf32>
    %13 = vector.broadcast %12 : vector<1x32xf32> to vector<8x32xf32>
    %14 = arith.addf %11, %13 : vector<8x32xf32>
    %cst_11 = arith.constant 0.000000e+00 : f32
    %15 = vector.broadcast %cst_11 : f32 to vector<8x32xf32>
    %16 = arith.maximumf %14, %15 : vector<8x32xf32>
    %17 = arith.truncf %16 : vector<8x32xf32> to vector<8x32xbf16>
    %c0_12 = arith.constant 0 : index
    %c0_13 = arith.constant 0 : index
    %18 = vector.load %arg6[%c0_12, %c0_13] : memref<32x16xbf16, #tpu.memory_space<vmem>>, vector<32x16xbf16>
    %cst_14 = arith.constant dense<0.000000e+00> : vector<8x16xf32>
    %19 = tpu.matmul %17, %18, %cst_14 {dimension_numbers = #tpu.dot_dimension_numbers<[1], [0], [0], [1], [0, 0, 1, 1], [], []>} : vector<8x32xbf16>, vector<32x16xbf16>, vector<8x16xf32> -> vector<8x16xf32>
    %c0_15 = arith.constant 0 : index
    %c0_16 = arith.constant 0 : index
    %20 = vector.load %arg7[%c0_15, %c0_16] : memref<1x16xf32, #tpu.memory_space<vmem>>, vector<1x16xf32>
    %21 = vector.broadcast %20 : vector<1x16xf32> to vector<8x16xf32>
    %22 = arith.addf %19, %21 : vector<8x16xf32>
    %cst_17 = arith.constant 0.000000e+00 : f32
    %23 = vector.broadcast %cst_17 : f32 to vector<8x16xf32>
    %24 = arith.maximumf %22, %23 : vector<8x16xf32>
    %25 = arith.truncf %24 : vector<8x16xf32> to vector<8x16xbf16>
    %c0_18 = arith.constant 0 : index
    %c0_19 = arith.constant 0 : index
    %26 = vector.load %arg8[%c0_18, %c0_19] : memref<16x2xbf16, #tpu.memory_space<vmem>>, vector<16x2xbf16>
    %cst_20 = arith.constant dense<0.000000e+00> : vector<8x2xf32>
    %27 = tpu.matmul %25, %26, %cst_20 {dimension_numbers = #tpu.dot_dimension_numbers<[1], [0], [0], [1], [0, 0, 1, 1], [], []>} : vector<8x16xbf16>, vector<16x2xbf16>, vector<8x2xf32> -> vector<8x2xf32>
    %c0_21 = arith.constant 0 : index
    %c0_22 = arith.constant 0 : index
    %28 = vector.load %arg9[%c0_21, %c0_22] : memref<1x2xf32, #tpu.memory_space<vmem>>, vector<1x2xf32>
    %29 = vector.broadcast %28 : vector<1x2xf32> to vector<8x2xf32>
    %30 = arith.addf %27, %29 : vector<8x2xf32>
    %c0_23 = arith.constant 0 : index
    %c0_24 = arith.constant 0 : index
    %31 = vector.load %arg10[%c0_23, %c0_24] : memref<8x2xf32, #tpu.memory_space<vmem>>, vector<8x2xf32>
    tpu.vector_store %arg10[%c0_23, %c0_24], %30 {strides = array<i32>} : memref<8x2xf32, #tpu.memory_space<vmem>>, vector<8x2xf32>,
    return
  }
  func.func @transform_0(%arg0: i32) -> (i32, i32) {
    %c0_i32 = arith.constant 0 : i32
    %c0_i32_0 = arith.constant 0 : i32
    return %arg0, %c0_i32 : i32, i32
  }
  func.func @transform_1(%arg0: i32) -> (i32, i32) {
    %c0_i32 = arith.constant 0 : i32
    %c0_i32_0 = arith.constant 0 : i32
    %c0_i32_1 = arith.constant 0 : i32
    return %c0_i32, %c0_i32_0 : i32, i32
  }
  func.func @transform_2(%arg0: i32) -> (i32, i32) {
    %c0_i32 = arith.constant 0 : i32
    %c0_i32_0 = arith.constant 0 : i32
    %c0_i32_1 = arith.constant 0 : i32
    return %c0_i32, %c0_i32_0 : i32, i32
  }
  func.func @transform_3(%arg0: i32) -> (i32, i32) {
    %c0_i32 = arith.constant 0 : i32
    %c0_i32_0 = arith.constant 0 : i32
    %c0_i32_1 = arith.constant 0 : i32
    return %c0_i32, %c0_i32_0 : i32, i32
  }
  func.func @transform_4(%arg0: i32) -> (i32, i32) {
    %c0_i32 = arith.constant 0 : i32
    %c0_i32_0 = arith.constant 0 : i32
    %c0_i32_1 = arith.constant 0 : i32
    return %c0_i32, %c0_i32_0 : i32, i32
  }
  func.func @transform_5(%arg0: i32) -> (i32, i32) {
    %c0_i32 = arith.constant 0 : i32
    %c0_i32_0 = arith.constant 0 : i32
    %c0_i32_1 = arith.constant 0 : i32
    return %c0_i32, %c0_i32_0 : i32, i32
  }
  func.func @transform_6(%arg0: i32) -> (i32, i32) {
    %c0_i32 = arith.constant 0 : i32
    %c0_i32_0 = arith.constant 0 : i32
    %c0_i32_1 = arith.constant 0 : i32
    return %c0_i32, %c0_i32_0 : i32, i32
  }
  func.func @transform_7(%arg0: i32) -> (i32, i32) {
    %c0_i32 = arith.constant 0 : i32
    %c0_i32_0 = arith.constant 0 : i32
    %c0_i32_1 = arith.constant 0 : i32
    return %c0_i32, %c0_i32_0 : i32, i32
  }
  func.func @transform_8(%arg0: i32) -> (i32, i32) {
    %c0_i32 = arith.constant 0 : i32
    %c0_i32_0 = arith.constant 0 : i32
    %c0_i32_1 = arith.constant 0 : i32
    return %c0_i32, %c0_i32_0 : i32, i32
  }
  func.func @transform_9(%arg0: i32) -> (i32, i32) {
    %c0_i32 = arith.constant 0 : i32
    %c0_i32_0 = arith.constant 0 : i32
    return %arg0, %c0_i32 : i32, i32
  }
}

</mosaic_0001>

<llo_original>
// kernel: classificator_forward.1
$region0: #{classificator_forward.1}
  #allocation0 [shape = 'u32[]', space=smem, size = 0x4, offset = 0x4, fixed_abs, tag = 'smem constant byte address 0x4 - core index']
  #allocation1 [shape = 'u32[72,128]{1,0:T(1,128)}', space=vmem, size = 0x9000, scoped, tag = 'internal scratch']
  %s0 = inlined_call_operand.vmem [shape: f32[8,128], index: 0, kind: input, shape index: {}]
  %s1 = inlined_call_operand.vmem [shape: bf16[128,64], index: 1, kind: input, shape index: {}]
  %s2 = inlined_call_operand.vmem [shape: f32[1,64], index: 2, kind: input, shape index: {}]
  %s3 = inlined_call_operand.vmem [shape: bf16[64,32], index: 3, kind: input, shape index: {}]
  %s4 = inlined_call_operand.vmem [shape: f32[1,32], index: 4, kind: input, shape index: {}]
  %s5 = inlined_call_operand.vmem [shape: bf16[32,16], index: 5, kind: input, shape index: {}]
  %s6 = inlined_call_operand.vmem [shape: f32[1,16], index: 6, kind: input, shape index: {}]
  %s7 = inlined_call_operand.vmem [shape: bf16[16,2], index: 7, kind: input, shape index: {}]
  %s8 = inlined_call_operand.vmem [shape: f32[1,2], index: 8, kind: input, shape index: {}]
  %s9 = inlined_call_operand.vmem [shape: f32[8,2], index: 9, kind: output, shape index: {}]
  %s10 = sld [smem:[#allocation0]]
  $region46: #{classificator_forward.1} parent=0
    _
  %s12 = ssub.s32 1, %s10
  %s13 = scalar_select 0, %s12, %s10
  // Predicated region
  $region2: #{classificator_forward.1} parent=0 // pred_check
    _
  $region3: #{classificator_forward.1} parent=0 // pred_check_branch
    %15 = sbr.rel (0) target = $region5
  $region4: #{classificator_forward.1} parent=0 // pred_region
    _
  $region5: #{classificator_forward.1} parent=0 // pred_fallthru
    _
  // Predicated region
  $region6: #{classificator_forward.1} parent=0 // pred_check
    _
  $region7: #{classificator_forward.1} parent=0 // pred_check_branch
    %17 = sbr.rel (0) target = $region9
  $region8: #{classificator_forward.1} parent=0 // pred_region
    _
  $region9: #{classificator_forward.1} parent=0 // pred_fallthru
    _
  // Predicated region
  $region10: #{classificator_forward.1} parent=0 // pred_check
    _
  $region11: #{classificator_forward.1} parent=0 // pred_check_branch
    %19 = sbr.rel (0) target = $region13
  $region12: #{classificator_forward.1} parent=0 // pred_region
    _
  $region13: #{classificator_forward.1} parent=0 // pred_fallthru
    _
  // Predicated region
  $region14: #{classificator_forward.1} parent=0 // pred_check
    _
  $region15: #{classificator_forward.1} parent=0 // pred_check_branch
    %21 = sbr.rel (0) target = $region17
  $region16: #{classificator_forward.1} parent=0 // pred_region
    _
  $region17: #{classificator_forward.1} parent=0 // pred_fallthru
    _
  // Predicated region
  $region18: #{classificator_forward.1} parent=0 // pred_check
    _
  $region19: #{classificator_forward.1} parent=0 // pred_check_branch
    %23 = sbr.rel (0) target = $region21
  $region20: #{classificator_forward.1} parent=0 // pred_region
    _
  $region21: #{classificator_forward.1} parent=0 // pred_fallthru
    _
  // Predicated region
  $region22: #{classificator_forward.1} parent=0 // pred_check
    _
  $region23: #{classificator_forward.1} parent=0 // pred_check_branch
    %25 = sbr.rel (0) target = $region25
  $region24: #{classificator_forward.1} parent=0 // pred_region
    _
  $region25: #{classificator_forward.1} parent=0 // pred_fallthru
    _
  // Predicated region
  $region26: #{classificator_forward.1} parent=0 // pred_check
    _
  $region27: #{classificator_forward.1} parent=0 // pred_check_branch
    %27 = sbr.rel (0) target = $region29
  $region28: #{classificator_forward.1} parent=0 // pred_region
    _
  $region29: #{classificator_forward.1} parent=0 // pred_fallthru
    _
  // Predicated region
  $region30: #{classificator_forward.1} parent=0 // pred_check
    _
  $region31: #{classificator_forward.1} parent=0 // pred_check_branch
    %29 = sbr.rel (0) target = $region33
  $region32: #{classificator_forward.1} parent=0 // pred_region
    _
  $region33: #{classificator_forward.1} parent=0 // pred_fallthru
    _
  // Predicated region
  $region34: #{classificator_forward.1} parent=0 // pred_check
    _
  $region35: #{classificator_forward.1} parent=0 // pred_check_branch
    %31 = sbr.rel (0) target = $region37
  $region36: #{classificator_forward.1} parent=0 // pred_region
    _
  $region37: #{classificator_forward.1} parent=0 // pred_fallthru
    _
  %v33 = vld [vmem:[%s0] sm:$0xff]
  %v34 = vpack.c.bf16 %v33, %v33
  %v35 = vld [vmem:[%s1] sm:$0xf]
  %v36 = vld [vmem:[%s1 + $0x4] sm:$0xf]
  %v37 = vld [vmem:[%s1 + $0x8] sm:$0xf]
  %v38 = vld [vmem:[%s1 + $0xc] sm:$0xf]
  %v39 = vld [vmem:[%s1 + $0x10] sm:$0xf]
  %v40 = vld [vmem:[%s1 + $0x14] sm:$0xf]
  %v41 = vld [vmem:[%s1 + $0x18] sm:$0xf]
  %v42 = vld [vmem:[%s1 + $0x1c] sm:$0xf]
  %v43 = vld [vmem:[%s1 + $0x20] sm:$0xf]
  %v44 = vld [vmem:[%s1 + $0x24] sm:$0xf]
  %v45 = vld [vmem:[%s1 + $0x28] sm:$0xf]
  %v46 = vld [vmem:[%s1 + $0x2c] sm:$0xf]
  %v47 = vld [vmem:[%s1 + $0x30] sm:$0xf]
  %v48 = vld [vmem:[%s1 + $0x34] sm:$0xf]
  %v49 = vld [vmem:[%s1 + $0x38] sm:$0xf]
  %v50 = vld [vmem:[%s1 + $0x3c] sm:$0xf]
  %v51 = vld [vmem:[%s2] sm:$0x1]
  %v53 = vperm.slane %v51, 0
  %v71 = vunpack.c.l.b16 %v35
  %v72 = vunpack.c.l.b16 %v36
  %v73 = vunpack.c.l.b16 %v37
  %v74 = vunpack.c.l.b16 %v38
  %v75 = vunpack.c.l.b16 %v39
  %v76 = vunpack.c.l.b16 %v40
  %v77 = vunpack.c.l.b16 %v41
  %v78 = vunpack.c.l.b16 %v42
  %v79 = vunpack.c.l.b16 %v43
  %v80 = vunpack.c.l.b16 %v44
  %v81 = vunpack.c.l.b16 %v45
  %v82 = vunpack.c.l.b16 %v46
  %v83 = vunpack.c.l.b16 %v47
  %v84 = vunpack.c.l.b16 %v48
  %v85 = vunpack.c.l.b16 %v49
  %v86 = vunpack.c.l.b16 %v50
  %v87 = vpack.c.b16 %v72, %v71
  %v88 = vpack.c.b16 %v74, %v73
  %v89 = vpack.c.b16 %v76, %v75
  %v90 = vpack.c.b16 %v78, %v77
  %v91 = vpack.c.b16 %v80, %v79
  %v92 = vpack.c.b16 %v82, %v81
  %v93 = vpack.c.b16 %v84, %v83
  %v94 = vpack.c.b16 %v86, %v85
  %103 = vmatpush.bf16.msra.mxu0 %v94
  %104 = vmatpush.bf16.msra.mxu0 %v93
  %105 = vmatpush.bf16.msra.mxu0 %v92
  %106 = vmatpush.bf16.msra.mxu0 %v91
  %107 = vmatpush.bf16.msra.mxu0 %v90
  %108 = vmatpush.bf16.msra.mxu0 %v89
  %109 = vmatpush.bf16.msra.mxu0 %v88
  %110 = vmatpush.bf16.msra.mxu0 %v87
  %111 = vmatmul.bf16.gmra.mxu0 %v34
  %v112 = vpop.f32.mrf.mxu0
  %v113 = vadd.f32 %v53, %v112
  %v114 = vpop.f32.mrf.mxu0
  %115 = vdwg.mxu0
  %v116 = vmax.f32 %v113, 0.0
  %v117 = vpack.c.bf16 %v116, %v116
  %v118 = vld [vmem:[%s3] sm:$0xf]
  %v119 = vld [vmem:[%s3 + $0x4] sm:$0xf]
  %v120 = vld [vmem:[%s3 + $0x8] sm:$0xf]
  %v121 = vld [vmem:[%s3 + $0xc] sm:$0xf]
  %v122 = vld [vmem:[%s3 + $0x10] sm:$0xf]
  %v123 = vld [vmem:[%s3 + $0x14] sm:$0xf]
  %v124 = vld [vmem:[%s3 + $0x18] sm:$0xf]
  %v125 = vld [vmem:[%s3 + $0x1c] sm:$0xf]
  %v126 = vld [vmem:[%s4] sm:$0x1]
  %v128 = vperm.slane %v126, 0
  %v138 = vunpack.c.l.b16 %v118
  %v139 = vunpack.c.l.b16 %v119
  %v140 = vunpack.c.l.b16 %v120
  %v141 = vunpack.c.l.b16 %v121
  %v142 = vunpack.c.l.b16 %v122
  %v143 = vunpack.c.l.b16 %v123
  %v144 = vunpack.c.l.b16 %v124
  %v145 = vunpack.c.l.b16 %v125
  %v146 = vpack.c.b16 %v139, %v138
  %v147 = vpack.c.b16 %v141, %v140
  %v148 = vpack.c.b16 %v143, %v142
  %v149 = vpack.c.b16 %v145, %v144
  %vm154 = vcmask 523264
  %v156 = vsel %vm154, %v117, 0
  %158 = vmatpush.bf16.msra.mxu0 0
  %159 = vmatpush.bf16.msra.mxu0 0
  %160 = vmatpush.bf16.msra.mxu0 0
  %161 = vmatpush.bf16.msra.mxu0 0
  %162 = vmatpush.bf16.msra.mxu0 %v149
  %163 = vmatpush.bf16.msra.mxu0 %v148
  %164 = vmatpush.bf16.msra.mxu0 %v147
  %165 = vmatpush.bf16.msra.mxu0 %v146
  %166 = vmatmul.bf16.gmra.mxu0 %v156
  %v167 = vpop.f32.mrf.mxu0
  %v168 = vadd.f32 %v128, %v167
  %v169 = vpop.f32.mrf.mxu0
  %170 = vdwg.mxu0
  %v171 = vmax.f32 %v168, 0.0
  %v172 = vpack.c.bf16 %v171, %v171
  %v173 = vld [vmem:[%s5] sm:$0xf]
  %v174 = vld [vmem:[%s5 + $0x4] sm:$0xf]
  %v175 = vld [vmem:[%s5 + $0x8] sm:$0xf]
  %v176 = vld [vmem:[%s5 + $0xc] sm:$0xf]
  %v177 = vld [vmem:[%s6] sm:$0x1]
  %v179 = vperm.slane %v177, 0
  %v185 = vunpack.c.l.b16 %v173
  %v186 = vunpack.c.l.b16 %v174
  %v187 = vunpack.c.l.b16 %v175
  %v188 = vunpack.c.l.b16 %v176
  %v189 = vpack.c.b16 %v186, %v185
  %v190 = vpack.c.b16 %v188, %v187
  %vm193 = vcmask 261120
  %v195 = vsel %vm193, %v172, 0
  %197 = vmatpush.bf16.msra.mxu0 0
  %198 = vmatpush.bf16.msra.mxu0 0
  %199 = vmatpush.bf16.msra.mxu0 0
  %200 = vmatpush.bf16.msra.mxu0 0
  %201 = vmatpush.bf16.msra.mxu0 0
  %202 = vmatpush.bf16.msra.mxu0 0
  %203 = vmatpush.bf16.msra.mxu0 %v190
  %204 = vmatpush.bf16.msra.mxu0 %v189
  %205 = vmatmul.bf16.gmra.mxu0 %v195
  %v206 = vpop.f32.mrf.mxu0
  %v207 = vadd.f32 %v179, %v206
  %v208 = vpop.f32.mrf.mxu0
  %209 = vdwg.mxu0
  %v210 = vmax.f32 %v207, 0.0
  %v211 = vpack.c.bf16 %v210, %v210
  %v212 = vld [vmem:[%s7] sm:$0xf]
  %v213 = vld [vmem:[%s7 + $0x4] sm:$0xf]
  %v214 = vld [vmem:[%s8] sm:$0x1]
  %v216 = vperm.slane %v214, 0
  %v220 = vunpack.c.l.b16 %v212
  %v221 = vunpack.c.l.b16 %v213
  %v222 = vpack.c.b16 %v221, %v220
  %vm224 = vcmask 130048
  %v226 = vsel %vm224, %v211, 0
  %228 = vmatpush.bf16.msra.mxu0 0
  %229 = vmatpush.bf16.msra.mxu0 0
  %230 = vmatpush.bf16.msra.mxu0 0
  %231 = vmatpush.bf16.msra.mxu0 0
  %232 = vmatpush.bf16.msra.mxu0 0
  %233 = vmatpush.bf16.msra.mxu0 0
  %234 = vmatpush.bf16.msra.mxu0 0
  %235 = vmatpush.bf16.msra.mxu0 %v222
  %236 = vmatmul.bf16.gmra.mxu0 %v226
  %v237 = vpop.f32.mrf.mxu0
  %v238 = vadd.f32 %v216, %v237
  %v239 = vpop.f32.mrf.mxu0
  %240 = vdwg.mxu0
  %vm241 = vcmask 15360
  %242 = vst.msk [vmem:[%s9] sm:$0xff] %vm241, %v238
  // Predicated region
  $region38: #{classificator_forward.1} parent=0 // pred_check
    _
  $region39: #{classificator_forward.1} parent=0 // pred_check_branch
    %244 = sbr.rel (0) target = $region41
  $region40: #{classificator_forward.1} parent=0 // pred_region
    _
  $region41: #{classificator_forward.1} parent=0 // pred_fallthru
    _
  // Predicated region
  $region42: #{classificator_forward.1} parent=0 // pred_check
    _
  $region43: #{classificator_forward.1} parent=0 // pred_check_branch
    %246 = sbr.rel (0) target = $region45
  $region44: #{classificator_forward.1} parent=0 // pred_region
    _
  $region45: #{classificator_forward.1} parent=0 // pred_fallthru
    _

</llo_original>
